<compile_context>
chip_gen: v6e
topology: v6e:2x2x1
jax: 0.10.0
libtpu: 0.0.40
codegen_flags: <defaults>
</compile_context>

<pallas_src>
import jax
import jax.numpy as jnp
from jax.experimental import pallas as pl
from jax.experimental.pallas import tpu as pltpu


# ----------------------------------------------------------------------------
# Kernel 1: fused coarse + fine encoder
#   enc = relu(relu(X @ W1 + b1) @ W2 + b2)
# Grid = (batch tiles, F reduction tiles); F is the innermost ("arbitrary")
# axis with an f32 VMEM accumulator; the fine layer runs in the finalize step.
# ----------------------------------------------------------------------------
def _encoder_kernel(x_ref, w1_ref, b1_ref, w2_ref, b2_ref, o_ref, acc_ref):
    k = pl.program_id(1)

    @pl.when(k == 0)
    def _():
        acc_ref[...] = jnp.zeros_like(acc_ref)

    # coarse partial: [tb, tf] @ [tf, D] -> accumulate in f32
    acc_ref[...] += jnp.dot(x_ref[...], w1_ref[...],
                            preferred_element_type=jnp.float32)

    @pl.when(k == pl.num_programs(1) - 1)
    def _():
        h = jnp.maximum(acc_ref[...] + b1_ref[...], 0.0)
        # fine: [tb, D] @ [D, D]  (bf16 inputs, f32 accumulate)
        g = jnp.dot(h.astype(w2_ref.dtype), w2_ref[...],
                    preferred_element_type=jnp.float32)
        o_ref[...] = jnp.maximum(g + b2_ref[...], 0.0).astype(o_ref.dtype)


def encode(x, w1, b1, w2, b2, *, tile_b=512, tile_f=2048,
           out_dtype=jnp.bfloat16):
    """relu(relu(x @ w1 + b1) @ w2 + b2); w1/w2 stored [in, out] (bf16).

    `w1` must already be padded (at init) so its vocab dim is a multiple of
    tile_f (or smaller than it); only the cheap (B, pad) activation pad is
    done per call.
    """
    Fw, D = w1.shape
    B, Fx = x.shape

    x = x.astype(w1.dtype)                      # stream activations in bf16
    if Fx < Fw:                                 # match pre-padded weight rows
        x = jnp.pad(x, ((0, 0), (0, Fw - Fx)))
    F = Fw

    tb = min(tile_b, B)
    tf = min(tile_f, F)
    assert F % tf == 0, (
        "vocab dim of w1 must be padded to a multiple of tile_f at init "
        "(see init_params); got F=%d, tf=%d" % (F, tf))

    grid = (pl.cdiv(B, tb), F // tf)
    return pl.pallas_call(
        _encoder_kernel,
        out_shape=jax.ShapeDtypeStruct((B, D), out_dtype),
        grid_spec=pltpu.PrefetchScalarGridSpec(
            num_scalar_prefetch=0,
            grid=grid,
            in_specs=[
                pl.BlockSpec((tb, tf), lambda i, k: (i, k)),   # X tile
                pl.BlockSpec((tf, D), lambda i, k: (k, 0)),    # W1 slab (bf16)
                pl.BlockSpec((1, D), lambda i, k: (0, 0)),     # b1 (resident)
                pl.BlockSpec((D, D), lambda i, k: (0, 0)),     # W2 (resident)
                pl.BlockSpec((1, D), lambda i, k: (0, 0)),     # b2 (resident)
            ],
            out_specs=pl.BlockSpec((tb, D), lambda i, k: (i, 0)),
            # bf16 output + f32 accumulation => keep the f32 scratch.
            scratch_shapes=[pltpu.VMEM((tb, D), jnp.float32)],
        ),
        compiler_params=pltpu.CompilerParams(
            dimension_semantics=("parallel", "arbitrary")),
    )(x, w1, b1, w2, b2)


# ----------------------------------------------------------------------------
# Kernel 2: 1-vs-all classifier, grid = (label tiles, batch tiles)
#   Labels are the OUTER axis so the (L/tl, D, tl) packed weight is streamed
#   from HBM exactly once; the small enc tile is re-fetched per batch step.
# ----------------------------------------------------------------------------
def _classifier_kernel(enc_ref, w_ref, b_ref, o_ref):
    acc = jnp.dot(enc_ref[...], w_ref[0],            # [tb,D] @ [D,tl] -> f32
                  preferred_element_type=jnp.float32)
    o_ref[...] = (acc + b_ref[...]).astype(o_ref.dtype)


def classify(enc, w_clf, b_clf, *, tile_b=256, out_dtype=jnp.bfloat16,
             vmem_limit_bytes=None):
    """enc @ Wc + bc with Wc pre-packed as (L/tl, D, tl) contiguous tiles."""
    B, D = enc.shape
    Lt, Dw, tl = w_clf.shape
    assert Dw == D, f"classifier expects packed Wc of shape (Lt, {D}, tl)"
    L_pad = Lt * tl

    if enc.dtype != w_clf.dtype:                 # normally already bf16
        enc = enc.astype(w_clf.dtype)
    tb = min(tile_b, B)

    # Consistent double-buffered VMEM footprint; only raise the scoped limit
    # when the default (~32 MiB) would be tight, cap under v7x's 64 MiB.
    if vmem_limit_bytes is None:
        wb = jnp.dtype(w_clf.dtype).itemsize
        eb = jnp.dtype(enc.dtype).itemsize
        ob = jnp.dtype(out_dtype).itemsize
        need = 2 * (D * tl * wb        # Wc tile
                    + tb * tl * ob     # output tile
                    + tb * D * eb      # enc tile
                    + tl * 4)          # bias tile (f32)
        if need > (30 << 20):
            vmem_limit_bytes = min(need + (4 << 20), 56 << 20)

    grid = (Lt, pl.cdiv(B, tb))        # labels outer -> Wc streamed once,
                                       # and leading parallel axis for megacore
    return pl.pallas_call(
        _classifier_kernel,
        out_shape=jax.ShapeDtypeStruct((B, L_pad), out_dtype),
        grid_spec=pltpu.PrefetchScalarGridSpec(
            num_scalar_prefetch=0,
            grid=grid,
            in_specs=[
                pl.BlockSpec((tb, D), lambda j, i: (i, 0)),       # enc tile
                pl.BlockSpec((1, D, tl), lambda j, i: (j, 0, 0)),  # Wc tile
                pl.BlockSpec((1, tl), lambda j, i: (0, j)),        # bias tile
            ],
            out_specs=pl.BlockSpec((tb, tl), lambda j, i: (i, j)),
        ),
        compiler_params=pltpu.CompilerParams(
            dimension_semantics=("parallel", "parallel"),
            vmem_limit_bytes=vmem_limit_bytes),
    )(enc, w_clf, b_clf)


# ----------------------------------------------------------------------------
# One-time parameter preparation (padding + classifier-weight packing)
# ----------------------------------------------------------------------------
def pack_classifier_weights(w_clf_2d, b_clf, tile_labels):
    """(D, L) -> (Lt, D, tl) so each label tile is one contiguous HBM burst."""
    D, L = w_clf_2d.shape
    tl = min(tile_labels, L)
    L_pad = pl.cdiv(L, tl) * tl
    if L_pad != L:
        w_clf_2d = jnp.pad(w_clf_2d, ((0, 0), (0, L_pad - L)))
        b_clf = jnp.pad(b_clf, ((0, 0), (0, L_pad - L)))
    Lt = L_pad // tl
    w_clf_3d = w_clf_2d.reshape(D, Lt, tl).transpose(1, 0, 2)
    return w_clf_3d, b_clf


def init_params(key, vocab_dims, repr_dims, num_labels, *,
                tile_f=2048, tile_labels=4096):
    k1, k2, k3 = jax.random.split(key, 3)
    s1 = 1.0 / jnp.sqrt(vocab_dims)
    s2 = 1.0 / jnp.sqrt(repr_dims)

    # Linear weights stored [in, out] (transposed vs PyTorch [out, in]),
    # streamed in bf16; biases kept in f32.
    w1 = (jax.random.normal(k1, (vocab_dims, repr_dims), jnp.float32)
          * s1).astype(jnp.bfloat16)
    w2 = (jax.random.normal(k2, (repr_dims, repr_dims), jnp.float32)
          * s2).astype(jnp.bfloat16)
    w_clf = (jax.random.normal(k3, (repr_dims, num_labels), jnp.float32)
             * s2).astype(jnp.bfloat16)
    b1 = jnp.zeros((1, repr_dims), jnp.float32)
    b2 = jnp.zeros((1, repr_dims), jnp.float32)
    b_clf = jnp.zeros((1, num_labels), jnp.float32)

    # One-time pad of the vocab axis so encode() never re-pads W1 per call.
    tf = min(tile_f, vocab_dims)
    F_pad = pl.cdiv(vocab_dims, tf) * tf
    w1_padded = jnp.pad(w1, ((0, F_pad - vocab_dims), (0, 0))) \
        if F_pad != vocab_dims else w1

    # One-time packing of the classifier weight into contiguous label tiles.
    w_clf_packed, b_clf_padded = pack_classifier_weights(w_clf, b_clf,
                                                         tile_labels)

    return {
        "w1": w1_padded, "b1": b1,
        "w2": w2, "b2": b2,
        "w_clf": w_clf_packed, "b_clf": b_clf_padded,
        "num_labels": num_labels,
        # raw (unpacked) copies kept only for reference checking in __main__
        "_w1_raw": w1, "_w_clf_raw": w_clf,
    }


# ----------------------------------------------------------------------------
# DeepXMLf forward (dense features, bypass_coarse=False, bypass_fine=False)
# ----------------------------------------------------------------------------
def deepxmlf_forward(x, params, *, tile_b_enc=512, tile_f=2048,
                     tile_b_clf=256):
    enc = encode(x, params["w1"], params["b1"], params["w2"], params["b2"],
                 tile_b=tile_b_enc, tile_f=tile_f)
    logits = classify(enc, params["w_clf"], params["b_clf"],
                      tile_b=tile_b_clf)
    L = params["num_labels"]
    return logits[:, :L] if logits.shape[1] != L else logits


if __name__ == "__main__":
    # Small shapes, chosen to exercise the F-tiling and label-tiling paths.
    B, VOCAB, REPR, NUM_LABELS = 8, 512, 128, 1024
    TILE_F, TILE_LABELS = 256, 512            # force >1 tile on both axes

    key = jax.random.PRNGKey(0)
    kx, kp = jax.random.split(key)
    x = jax.random.normal(kx, (B, VOCAB), jnp.float32)   # dense feats (X_ind=None)
    params = init_params(kp, VOCAB, REPR, NUM_LABELS,
                         tile_f=TILE_F, tile_labels=TILE_LABELS)

    logits = deepxmlf_forward(x, params, tile_b_enc=512, tile_f=TILE_F,
                              tile_b_clf=256)
    jax.block_until_ready(logits)
    assert logits.shape == (B, NUM_LABELS)
    assert logits.dtype == jnp.bfloat16

    # Reference in plain JAX, mirroring the bf16-weight / f32-accumulate path.
    xb = x.astype(jnp.bfloat16)
    h = jnp.maximum(jnp.dot(xb, params["_w1_raw"],
                            preferred_element_type=jnp.float32)
                    + params["b1"], 0.0)
    g = jnp.maximum(jnp.dot(h.astype(jnp.bfloat16), params["w2"],
                            preferred_element_type=jnp.float32)
                    + params["b2"], 0.0)
    ref = (jnp.dot(g.astype(jnp.bfloat16), params["_w_clf_raw"],
                   preferred_element_type=jnp.float32)
           + params["b_clf"][:, :NUM_LABELS]).astype(jnp.bfloat16)

    out_f32 = logits.astype(jnp.float32)
    ref_f32 = ref.astype(jnp.float32)
    assert jnp.allclose(out_f32, ref_f32, atol=5e-2, rtol=5e-2), (
        float(jnp.max(jnp.abs(out_f32 - ref_f32))))

    print("KERNEL_OK")
</pallas_src>

<mosaic_0001>
module attributes {stable_mosaic.version = 11 : i64} {
  func.func @_encoder_kernel(%arg0: i32, %arg1: i32, %arg2: memref<8x256xbf16, #tpu.memory_space<vmem>>, %arg3: memref<256x128xbf16, #tpu.memory_space<vmem>>, %arg4: memref<1x128xf32, #tpu.memory_space<vmem>>, %arg5: memref<128x128xbf16, #tpu.memory_space<vmem>>, %arg6: memref<1x128xf32, #tpu.memory_space<vmem>>, %arg7: memref<8x128xbf16, #tpu.memory_space<vmem>>, %arg8: memref<8x128xf32, #tpu.memory_space<vmem>>) attributes {dimension_semantics = [#tpu.dimension_semantics<parallel>, #tpu.dimension_semantics<arbitrary>], iteration_bounds = array<i64: 1, 2>, scalar_prefetch = 0 : i64, scratch_operands = 1 : i64, tpu.core_type = #tpu.core_type<tc>, window_params = [{transform_indices = @transform_0, window_bounds = array<i64: 8, 256>}, {transform_indices = @transform_1, window_bounds = array<i64: 256, 128>}, {pipeline_mode = #tpu.pipeline_mode<synchronous>, transform_indices = @transform_2, window_bounds = array<i64: 1, 128>}, {pipeline_mode = #tpu.pipeline_mode<synchronous>, transform_indices = @transform_3, window_bounds = array<i64: 128, 128>}, {pipeline_mode = #tpu.pipeline_mode<synchronous>, transform_indices = @transform_4, window_bounds = array<i64: 1, 128>}, {transform_indices = @transform_5, window_bounds = array<i64: 8, 128>}]} {
    %c0_i32 = arith.constant 0 : i32
    %0 = arith.cmpi eq, %arg1, %c0_i32 : i32
    %1 = arith.extui %0 : i1 to i32
    %c0_i32_0 = arith.constant 0 : i32
    %2 = arith.cmpi ne, %1, %c0_i32_0 : i32
    scf.if %2 {
      %cst_9 = arith.constant 0.000000e+00 : f32
      %12 = vector.broadcast %cst_9 : f32 to vector<8x128xf32>
      %c0_10 = arith.constant 0 : index
      %c0_11 = arith.constant 0 : index
      %13 = vector.load %arg8[%c0_10, %c0_11] : memref<8x128xf32, #tpu.memory_space<vmem>>, vector<8x128xf32>
      tpu.vector_store %arg8[%c0_10, %c0_11], %12 {strides = array<i32>} : memref<8x128xf32, #tpu.memory_space<vmem>>, vector<8x128xf32>,
    } else {
    }
    %c0 = arith.constant 0 : index
    %c0_1 = arith.constant 0 : index
    %3 = vector.load %arg8[%c0, %c0_1] : memref<8x128xf32, #tpu.memory_space<vmem>>, vector<8x128xf32>
    %c0_2 = arith.constant 0 : index
    %c0_3 = arith.constant 0 : index
    %4 = vector.load %arg2[%c0_2, %c0_3] : memref<8x256xbf16, #tpu.memory_space<vmem>>, vector<8x256xbf16>
    %c0_4 = arith.constant 0 : index
    %c0_5 = arith.constant 0 : index
    %5 = vector.load %arg3[%c0_4, %c0_5] : memref<256x128xbf16, #tpu.memory_space<vmem>>, vector<256x128xbf16>
    %cst = arith.constant dense<0.000000e+00> : vector<8x128xf32>
    %6 = tpu.matmul %4, %5, %cst {dimension_numbers = #tpu.dot_dimension_numbers<[1], [0], [0], [1], [0, 0, 1, 1], [], []>} : vector<8x256xbf16>, vector<256x128xbf16>, vector<8x128xf32> -> vector<8x128xf32>
    %7 = arith.addf %3, %6 : vector<8x128xf32>
    %c0_6 = arith.constant 0 : index
    %c0_7 = arith.constant 0 : index
    %8 = vector.load %arg8[%c0_6, %c0_7] : memref<8x128xf32, #tpu.memory_space<vmem>>, vector<8x128xf32>
    tpu.vector_store %arg8[%c0_6, %c0_7], %7 {strides = array<i32>} : memref<8x128xf32, #tpu.memory_space<vmem>>, vector<8x128xf32>,
    %c1_i32 = arith.constant 1 : i32
    %9 = arith.cmpi eq, %arg1, %c1_i32 : i32
    %10 = arith.extui %9 : i1 to i32
    %c0_i32_8 = arith.constant 0 : i32
    %11 = arith.cmpi ne, %10, %c0_i32_8 : i32
    scf.if %11 {
      %c0_9 = arith.constant 0 : index
      %c0_10 = arith.constant 0 : index
      %12 = vector.load %arg8[%c0_9, %c0_10] : memref<8x128xf32, #tpu.memory_space<vmem>>, vector<8x128xf32>
      %c0_11 = arith.constant 0 : index
      %c0_12 = arith.constant 0 : index
      %13 = vector.load %arg4[%c0_11, %c0_12] : memref<1x128xf32, #tpu.memory_space<vmem>>, vector<1x128xf32>
      %14 = vector.broadcast %13 : vector<1x128xf32> to vector<8x128xf32>
      %15 = arith.addf %12, %14 : vector<8x128xf32>
      %cst_13 = arith.constant 0.000000e+00 : f32
      %16 = vector.broadcast %cst_13 : f32 to vector<8x128xf32>
      %17 = arith.maximumf %15, %16 : vector<8x128xf32>
      %18 = arith.truncf %17 : vector<8x128xf32> to vector<8x128xbf16>
      %c0_14 = arith.constant 0 : index
      %c0_15 = arith.constant 0 : index
      %19 = vector.load %arg5[%c0_14, %c0_15] : memref<128x128xbf16, #tpu.memory_space<vmem>>, vector<128x128xbf16>
      %cst_16 = arith.constant dense<0.000000e+00> : vector<8x128xf32>
      %20 = tpu.matmul %18, %19, %cst_16 {dimension_numbers = #tpu.dot_dimension_numbers<[1], [0], [0], [1], [0, 0, 1, 1], [], []>} : vector<8x128xbf16>, vector<128x128xbf16>, vector<8x128xf32> -> vector<8x128xf32>
      %c0_17 = arith.constant 0 : index
      %c0_18 = arith.constant 0 : index
      %21 = vector.load %arg6[%c0_17, %c0_18] : memref<1x128xf32, #tpu.memory_space<vmem>>, vector<1x128xf32>
      %22 = vector.broadcast %21 : vector<1x128xf32> to vector<8x128xf32>
      %23 = arith.addf %20, %22 : vector<8x128xf32>
      %cst_19 = arith.constant 0.000000e+00 : f32
      %24 = vector.broadcast %cst_19 : f32 to vector<8x128xf32>
      %25 = arith.maximumf %23, %24 : vector<8x128xf32>
      %26 = arith.truncf %25 : vector<8x128xf32> to vector<8x128xbf16>
      %c0_20 = arith.constant 0 : index
      %c0_21 = arith.constant 0 : index
      %27 = vector.load %arg7[%c0_20, %c0_21] : memref<8x128xbf16, #tpu.memory_space<vmem>>, vector<8x128xbf16>
      tpu.vector_store %arg7[%c0_20, %c0_21], %26 {strides = array<i32>} : memref<8x128xbf16, #tpu.memory_space<vmem>>, vector<8x128xbf16>,
    } else {
    }
    return
  }
  func.func @transform_0(%arg0: i32, %arg1: i32) -> (i32, i32) {
    %c0_i32 = arith.constant 0 : i32
    return %arg0, %arg1 : i32, i32
  }
  func.func @transform_1(%arg0: i32, %arg1: i32) -> (i32, i32) {
    %c0_i32 = arith.constant 0 : i32
    %c0_i32_0 = arith.constant 0 : i32
    return %arg1, %c0_i32 : i32, i32
  }
  func.func @transform_2(%arg0: i32, %arg1: i32) -> (i32, i32) {
    %c0_i32 = arith.constant 0 : i32
    %c0_i32_0 = arith.constant 0 : i32
    %c0_i32_1 = arith.constant 0 : i32
    return %c0_i32, %c0_i32_0 : i32, i32
  }
  func.func @transform_3(%arg0: i32, %arg1: i32) -> (i32, i32) {
    %c0_i32 = arith.constant 0 : i32
    %c0_i32_0 = arith.constant 0 : i32
    %c0_i32_1 = arith.constant 0 : i32
    return %c0_i32, %c0_i32_0 : i32, i32
  }
  func.func @transform_4(%arg0: i32, %arg1: i32) -> (i32, i32) {
    %c0_i32 = arith.constant 0 : i32
    %c0_i32_0 = arith.constant 0 : i32
    %c0_i32_1 = arith.constant 0 : i32
    return %c0_i32, %c0_i32_0 : i32, i32
  }
  func.func @transform_5(%arg0: i32, %arg1: i32) -> (i32, i32) {
    %c0_i32 = arith.constant 0 : i32
    %c0_i32_0 = arith.constant 0 : i32
    return %arg0, %c0_i32 : i32, i32
  }
}

</mosaic_0001>

<llo_original>
// kernel: tpu_custom_call.1
$region0: #{tpu_custom_call.1}
  #allocation0 [shape = 'u32[]', space=smem, size = 0x4, offset = 0x4, fixed_abs, tag = 'smem constant byte address 0x4 - core index']
  #allocation1 [shape = 'u32[144,128]{1,0:T(1,128)}', space=vmem, size = 0x12000, scoped, tag = 'internal scratch']
  #allocation2 [shape = 'f32[8,128]{1,0:T(8,128)}', space=vmem, size = 0x1000, scoped, tag = 'scratch operand']
  %s0 = inlined_call_operand.hbm [shape: bf16[8,512], index: 0, kind: input, shape index: {}]
  %s1 = inlined_call_operand.hbm [shape: bf16[512,128], index: 1, kind: input, shape index: {}]
  %s2 = inlined_call_operand.vmem [shape: f32[1,128], index: 2, kind: input, shape index: {}]
  %s3 = inlined_call_operand.hbm [shape: bf16[128,128], index: 3, kind: input, shape index: {}]
  %s4 = inlined_call_operand.vmem [shape: f32[1,128], index: 4, kind: input, shape index: {}]
  %s5 = inlined_call_operand.hbm [shape: bf16[8,128], index: 5, kind: output, shape index: {}]
  %s6 = sld [smem:[#allocation0]]
  $region73: #{tpu_custom_call.1} parent=0
    _
  %s8 = ssub.s32 1, %s6
  %s9 = scalar_select 0, %s8, %s6
  $region1: #{tpu_custom_call.1} parent=0
    #allocation3 [shape = 'u8[8192]{0}', space=vmem, size = 0x2000, scoped, tag = 'input window, operand 0']
    #allocation4 [shape = 's32[2]{0}', space=sflag, size = 0x8, scoped, tag = 'scoped memory for tpu_custom_call.1']
    #allocation5 [shape = 's32[2]{0}', space=sflag, size = 0x8, scoped, tag = 'scoped memory for tpu_custom_call.1']
    #allocation6 [shape = 'u8[131072]{0}', space=vmem, size = 0x20000, scoped, tag = 'input window, operand 1']
    #allocation7 [shape = 's32[2]{0}', space=sflag, size = 0x8, scoped, tag = 'scoped memory for tpu_custom_call.1']
    #allocation8 [shape = 'u8[32768]{0}', space=vmem, size = 0x8000, scoped, tag = 'input window, operand 3, single buffered']
    #allocation9 [shape = 'u8[2048]{0}', space=vmem, size = 0x800, scoped, tag = 'output window, operand 0, single buffered']
    %10 = vsyncpa [#allocation4], 0
    %s11 = scalar_lea.sflag [#allocation4], 1
    %12 = vsyncpa %s11, 0
    %13 = vsyncpa [#allocation7], 0
    %s14 = scalar_lea.sflag [#allocation7], 1
    %15 = vsyncpa %s14, 0
    %16 = vsyncpa [#allocation5], 0
    loop: start=0, step=1, limit=4
    $region2: #{tpu_custom_call.1} parent=1 // loop_pre_header
      _
    $region3: #{tpu_custom_call.1} parent=1 // loop_header
      %s18 = sphi 0, %s22
      %p19 = scmp.ge.s32.totalorder %s18, 4
      %s25 = sphi 0, %s37
      %s26 = sphi 0, %s33
      %s27 = sphi 0, %s25
      %s28 = sphi 0, %s26
      %s29 = sphi 0, %s27
      %s30 = sphi 0, %s28
      %s42 = sphi 0, %s44
      %s45 = sphi 0, %s42
      %s46 = sphi 0, %s45
      %s62 = sphi 0, %s46
      %s68 = sphi 0, %s70
      %s71 = sphi 0, %s68
      %s72 = sphi 0, %s71
      %s88 = sphi 0, %s72
      %s92 = sphi 0, %s92
      %s94 = sphi 0, %s92
      %s95 = sphi 0, %s94
      %s109 = sphi 0, %s95
      %s113 = sphi 0, %s113
      %s115 = sphi 0, %s113
      %s116 = sphi 0, %s115
      %s130 = sphi 0, %s116
      %s134 = sphi 0, %s134
      %s136 = sphi 0, %s134
      %s137 = sphi 0, %s136
      %s151 = sphi 0, %s137
      %s157 = sphi 0, %s159
      %s160 = sphi 0, %s157
      %s161 = sphi 0, %s160
      %s177 = sphi 0, %s161
    $region4: #{tpu_custom_call.1} parent=1 // loop_header_branch
      %21 = sbr.rel (%p19) target = $region8
    $region5: #{tpu_custom_call.1} parent=1 // loop_body
      %s23 = ssub.s32 %s18, 1
      %s24 = ssub.s32 %s18, 2
      %s31 = sadd.s32 1, %s26
      %p32 = scmp.ge.s32.totalorder %s31, 2
      %s33 = scalar_select %p32, 0, %s31
      %s34 = sadd.s32 1, %s25
      %s35 = scalar_select %p32, %s34, %s25
      %p36 = scmp.ge.s32.totalorder %s35, 1
      %s37 = scalar_select %p36, 0, %s35
      %s38 = ssub.s32 %s25, %s37
      %s39 = ssub.s32 %s26, %s33
      %s40 = sor.u32 %s38, %s39
      %p41 = scmp.eq.s32.totalorder %s40, 0
      %s43 = sadd.s32 %s42, 1
      %s44 = scalar_select %p41, %s42, %s43
      %p47 = pneg %p41
      %p48 = scmp.eq.s32.totalorder %s18, 1
      %p49 = por %p47, %p48
      %p50 = scmp.ne.s32.totalorder %s42, %s45
      %p51 = scmp.eq.s32.totalorder %s18, 0
      %p52 = por %p50, %p51
      %p53 = scmp.ne.s32.totalorder %s42, %s45
      %p54 = scmp.eq.s32.totalorder %s23, 1
      %p55 = por %p53, %p54
      %p56 = scmp.ne.s32.totalorder %s45, %s46
      %p57 = scmp.eq.s32.totalorder %s23, 0
      %p58 = por %p56, %p57
      %p59 = scmp.ne.s32.totalorder %s45, %s46
      %p60 = scmp.eq.s32.totalorder %s24, 1
      %p61 = por %p59, %p60
      %p63 = scmp.ne.s32.totalorder %s46, %s62
      %p64 = scmp.eq.s32.totalorder %s24, 0
      %p65 = por %p63, %p64
      %s66 = ssub.s32 %s26, %s33
      %p67 = scmp.eq.s32.totalorder %s66, 0
      %s69 = sadd.s32 %s68, 1
      %s70 = scalar_select %p67, %s68, %s69
      %p73 = pneg %p67
      %p74 = scmp.eq.s32.totalorder %s18, 1
      %p75 = por %p73, %p74
      %p76 = scmp.ne.s32.totalorder %s68, %s71
      %p77 = scmp.eq.s32.totalorder %s18, 0
      %p78 = por %p76, %p77
      %p79 = scmp.ne.s32.totalorder %s68, %s71
      %p80 = scmp.eq.s32.totalorder %s23, 1
      %p81 = por %p79, %p80
      %p82 = scmp.ne.s32.totalorder %s71, %s72
      %p83 = scmp.eq.s32.totalorder %s23, 0
      %p84 = por %p82, %p83
      %p85 = scmp.ne.s32.totalorder %s71, %s72
      %p86 = scmp.eq.s32.totalorder %s24, 1
      %p87 = por %p85, %p86
      %p89 = scmp.ne.s32.totalorder %s72, %s88
      %p90 = scmp.eq.s32.totalorder %s24, 0
      %p91 = por %p89, %p90
      %s93 = sadd.s32 %s92, 1
      %p96 = scmp.eq.s32.totalorder %s18, 1
      %p97 = scmp.ne.s32.totalorder %s92, %s94
      %p98 = scmp.eq.s32.totalorder %s18, 0
      %p99 = por %p97, %p98
      %p100 = scmp.ne.s32.totalorder %s92, %s94
      %p101 = scmp.eq.s32.totalorder %s23, 1
      %p102 = por %p100, %p101
      %p103 = scmp.ne.s32.totalorder %s94, %s95
      %p104 = scmp.eq.s32.totalorder %s23, 0
      %p105 = por %p103, %p104
      %p106 = scmp.ne.s32.totalorder %s94, %s95
      %p107 = scmp.eq.s32.totalorder %s24, 1
      %p108 = por %p106, %p107
      %p110 = scmp.ne.s32.totalorder %s95, %s109
      %p111 = scmp.eq.s32.totalorder %s24, 0
      %p112 = por %p110, %p111
      %s114 = sadd.s32 %s113, 1
      %p117 = scmp.eq.s32.totalorder %s18, 1
      %p118 = scmp.ne.s32.totalorder %s113, %s115
      %p119 = scmp.eq.s32.totalorder %s18, 0
      %p120 = por %p118, %p119
      %p121 = scmp.ne.s32.totalorder %s113, %s115
      %p122 = scmp.eq.s32.totalorder %s23, 1
      %p123 = por %p121, %p122
      %p124 = scmp.ne.s32.totalorder %s115, %s116
      %p125 = scmp.eq.s32.totalorder %s23, 0
      %p126 = por %p124, %p125
      %p127 = scmp.ne.s32.totalorder %s115, %s116
      %p128 = scmp.eq.s32.totalorder %s24, 1
      %p129 = por %p127, %p128
      %p131 = scmp.ne.s32.totalorder %s116, %s130
      %p132 = scmp.eq.s32.totalorder %s24, 0
      %p133 = por %p131, %p132
      %s135 = sadd.s32 %s134, 1
      %p138 = scmp.eq.s32.totalorder %s18, 1
      %p139 = scmp.ne.s32.totalorder %s134, %s136
      %p140 = scmp.eq.s32.totalorder %s18, 0
      %p141 = por %p139, %p140
      %p142 = scmp.ne.s32.totalorder %s134, %s136
      %p143 = scmp.eq.s32.totalorder %s23, 1
      %p144 = por %p142, %p143
      %p145 = scmp.ne.s32.totalorder %s136, %s137
      %p146 = scmp.eq.s32.totalorder %s23, 0
      %p147 = por %p145, %p146
      %p148 = scmp.ne.s32.totalorder %s136, %s137
      %p149 = scmp.eq.s32.totalorder %s24, 1
      %p150 = por %p148, %p149
      %p152 = scmp.ne.s32.totalorder %s137, %s151
      %p153 = scmp.eq.s32.totalorder %s24, 0
      %p154 = por %p152, %p153
      %s155 = ssub.s32 %s25, %s37
      %p156 = scmp.eq.s32.totalorder %s155, 0
      %s158 = sadd.s32 %s157, 1
      %s159 = scalar_select %p156, %s157, %s158
      %p162 = pneg %p156
      %p163 = scmp.eq.s32.totalorder %s18, 1
      %p164 = por %p162, %p163
      %p165 = scmp.ne.s32.totalorder %s157, %s160
      %p166 = scmp.eq.s32.totalorder %s18, 0
      %p167 = por %p165, %p166
      %p168 = scmp.ne.s32.totalorder %s157, %s160
      %p169 = scmp.eq.s32.totalorder %s23, 1
      %p170 = por %p168, %p169
      %p171 = scmp.ne.s32.totalorder %s160, %s161
      %p172 = scmp.eq.s32.totalorder %s23, 0
      %p173 = por %p171, %p172
      %p174 = scmp.ne.s32.totalorder %s160, %s161
      %p175 = scmp.eq.s32.totalorder %s24, 1
      %p176 = por %p174, %p175
      %p178 = scmp.ne.s32.totalorder %s161, %s177
      %p179 = scmp.eq.s32.totalorder %s24, 0
      %p180 = por %p178, %p179
      %p181 = scmp.le.s32.totalorder 1, %s18
      %p182 = scmp.lt.s32.totalorder %s18, 3
      %p183 = pnand %p181, %p182
      %p184 = pneg %p183
      // Predicated region
      $region9: #{tpu_custom_call.1} parent=5 // pred_check
        _
      $region10: #{tpu_custom_call.1} parent=5 // pred_check_branch
        %186 = sbr.rel (%p183) target = $region12
      $region11: #{tpu_custom_call.1} parent=5 // pred_region
        %s187 = ssub.s32 %s18, 1
        // Predicated region
        $region13: #{tpu_custom_call.1} parent=11 // pred_check
          %p188 = pneg %p105
        $region14: #{tpu_custom_call.1} parent=11 // pred_check_branch
          %190 = sbr.rel (%p188) target = $region16
        $region15: #{tpu_custom_call.1} parent=11 // pred_region
          _
        $region16: #{tpu_custom_call.1} parent=11 // pred_fallthru
          _
        // Predicated region
        $region17: #{tpu_custom_call.1} parent=11 // pred_check
          %p191 = pneg %p126
        $region18: #{tpu_custom_call.1} parent=11 // pred_check_branch
          %193 = sbr.rel (%p191) target = $region20
        $region19: #{tpu_custom_call.1} parent=11 // pred_region
          %s195 = ssub.s32 1024, 1024
          %196 = vsyncadd [#allocation7], %s195
          %s197 = sshll.u32 [#allocation8], 4
          %s198 = int_to_ptr.vmem [resolvable:$true] %s197
          %203 = dma.hbm_to_vmem [thread:$0]  %s3, 1024, %s198, [#allocation7], 64, 64, 4
        $region20: #{tpu_custom_call.1} parent=11 // pred_fallthru
          _
        // Predicated region
        $region21: #{tpu_custom_call.1} parent=11 // pred_check
          %p204 = pneg %p147
        $region22: #{tpu_custom_call.1} parent=11 // pred_check_branch
          %206 = sbr.rel (%p204) target = $region24
        $region23: #{tpu_custom_call.1} parent=11 // pred_region
          _
        $region24: #{tpu_custom_call.1} parent=11 // pred_fallthru
          _
      $region12: #{tpu_custom_call.1} parent=5 // pred_fallthru
        _
      %p207 = scmp.lt.s32.totalorder %s18, 2
      // Predicated region
      $region25: #{tpu_custom_call.1} parent=5 // pred_check
        %p208 = pneg %p207
      $region26: #{tpu_custom_call.1} parent=5 // pred_check_branch
        %210 = sbr.rel (%p208) target = $region28
      $region27: #{tpu_custom_call.1} parent=5 // pred_region
        // Predicated region
        $region29: #{tpu_custom_call.1} parent=27 // pred_check
          %p211 = pneg %p52
        $region30: #{tpu_custom_call.1} parent=27 // pred_check_branch
          %213 = sbr.rel (%p211) target = $region32
        $region31: #{tpu_custom_call.1} parent=27 // pred_region
          %s214 = sand.u32 %s42, 1
          %s215 = scalar_lea.sflag [#allocation4], %s214
          %s216 = sand.u32 %s42, 1
          %s217 = smul.addr %s216, 8
          %s218 = scalar_lea.vmem [#allocation3], %s217
          %s219 = smul.u32 2, %s26
          %s221 = ssub.s32 128, 128
          %222 = vsyncadd %s215, %s221
          %s223 = smul.addr %s25, 4
          %s224 = sadd.s32 %s219, %s223
          %s225 = smul.addr %s224, 64
          %s226 = scalar_lea.hbm %s0, %s225
          %s228 = sshll.u32 %s218, 4
          %s229 = int_to_ptr.vmem [resolvable:$true] %s228
          %231 = dma.hbm_to_vmem [thread:$0]  %s226, 128, %s229, %s215
        $region32: #{tpu_custom_call.1} parent=27 // pred_fallthru
          _
        // Predicated region
        $region33: #{tpu_custom_call.1} parent=27 // pred_check
          %p232 = pneg %p78
        $region34: #{tpu_custom_call.1} parent=27 // pred_check_branch
          %234 = sbr.rel (%p232) target = $region36
        $region35: #{tpu_custom_call.1} parent=27 // pred_region
          %s235 = sand.u32 %s18, 1
          %s236 = scalar_lea.sflag [#allocation7], %s235
          %s237 = sand.u32 %s68, 1
          %s238 = smul.addr %s237, 128
          %s239 = scalar_lea.vmem [#allocation6], %s238
          %s240 = smul.u32 32, %s26
          %s242 = ssub.s32 2048, 2048
          %243 = vsyncadd %s236, %s242
          %s244 = smul.addr %s240, 64
          %s245 = scalar_lea.hbm %s1, %s244
          %s246 = sshll.u32 %s239, 4
          %s247 = int_to_ptr.vmem [resolvable:$true] %s246
          %252 = dma.hbm_to_vmem [thread:$0]  %s245, 2048, %s247, %s236, 64, 64, 4
        $region36: #{tpu_custom_call.1} parent=27 // pred_fallthru
          _
      $region28: #{tpu_custom_call.1} parent=5 // pred_fallthru
        _
      %p253 = scmp.le.s32.totalorder 1, %s18
      %p254 = scmp.lt.s32.totalorder %s18, 3
      %p255 = pnand %p253, %p254
      %p256 = pneg %p255
      // Predicated region
      $region37: #{tpu_custom_call.1} parent=5 // pred_check
        _
      $region38: #{tpu_custom_call.1} parent=5 // pred_check_branch
        %258 = sbr.rel (%p255) target = $region40
      $region39: #{tpu_custom_call.1} parent=5 // pred_region
        %s259 = ssub.s32 %s18, 1
        %s260 = sand.u32 %s45, 1
        %s261 = scalar_lea.sflag [#allocation4], %s260
        %s262 = sand.u32 %s45, 1
        %s263 = smul.addr %s262, 8
        %s264 = scalar_lea.vmem [#allocation3], %s263
        // Predicated region
        $region41: #{tpu_custom_call.1} parent=39 // pred_check
          %p265 = pneg %p58
        $region42: #{tpu_custom_call.1} parent=39 // pred_check_branch
          %267 = sbr.rel (%p265) target = $region44
        $region43: #{tpu_custom_call.1} parent=39 // pred_region
          %268 = dma.done %s261, 128
        $region44: #{tpu_custom_call.1} parent=39 // pred_fallthru
          _
        %s269 = sand.u32 %s23, 1
        %s270 = scalar_lea.sflag [#allocation7], %s269
        %s271 = sand.u32 %s71, 1
        %s272 = smul.addr %s271, 128
        %s273 = scalar_lea.vmem [#allocation6], %s272
        // Predicated region
        $region45: #{tpu_custom_call.1} parent=39 // pred_check
          %p274 = pneg %p84
        $region46: #{tpu_custom_call.1} parent=39 // pred_check_branch
          %276 = sbr.rel (%p274) target = $region48
        $region47: #{tpu_custom_call.1} parent=39 // pred_region
          %277 = dma.done %s270, 2048
        $region48: #{tpu_custom_call.1} parent=39 // pred_fallthru
          _
        // Predicated region
        $region49: #{tpu_custom_call.1} parent=39 // pred_check
          %p278 = pneg %p126
        $region50: #{tpu_custom_call.1} parent=39 // pred_check_branch
          %280 = sbr.rel (%p278) target = $region52
        $region51: #{tpu_custom_call.1} parent=39 // pred_region
          %281 = dma.done [#allocation7], 1024
        $region52: #{tpu_custom_call.1} parent=39 // pred_fallthru
          _
        %s282 = sand.u32 %s45, 1
        %s283 = scalar_lea.sflag [#allocation4], %s282
        %s284 = sand.u32 %s45, 1
        %s285 = smul.addr %s284, 8
        %s286 = scalar_lea.vmem [#allocation3], %s285
        %p287 = pneg %p58
        %p288 = pneg %p55
        %s289 = sand.u32 %s23, 1
        %s290 = scalar_lea.sflag [#allocation7], %s289
        %s291 = sand.u32 %s71, 1
        %s292 = smul.addr %s291, 128
        %s293 = scalar_lea.vmem [#allocation6], %s292
        %p294 = pneg %p84
        %p295 = pneg %p81
        %p296 = pneg %p105
        %p297 = pneg %p102
        %p298 = pneg %p126
        %p299 = pneg %p123
        %p300 = pneg %p147
        %p301 = pneg %p144
        %p302 = pneg %p173
        %p303 = pneg %p170
        %s304 = smul.u32 2, %s28
        %s305 = smul.u32 32, %s28
        %p307 = scmp.eq.s32.totalorder %s28, 0
        // Predicated region
        $region53: #{tpu_custom_call.1} parent=39 // pred_check
          %p308 = pneg %p307
        $region54: #{tpu_custom_call.1} parent=39 // pred_check_branch
          %310 = sbr.rel (%p308) target = $region56
        $region55: #{tpu_custom_call.1} parent=39 // pred_region
          %311 = vst [vmem:[#allocation2] sm:$0xff] 0.0
        $region56: #{tpu_custom_call.1} parent=39 // pred_fallthru
          _
        %v312 = vld [vmem:[#allocation2] sm:$0xff]
        %v313 = vld [vmem:[%s264] sm:$0xff]
        %v314 = vld [vmem:[%s273] sm:$0xf]
        %v315 = vld [vmem:[%s273 + $0x4] sm:$0xf]
        %v316 = vld [vmem:[%s273 + $0x8] sm:$0xf]
        %v317 = vld [vmem:[%s273 + $0xc] sm:$0xf]
        %v318 = vld [vmem:[%s273 + $0x10] sm:$0xf]
        %v319 = vld [vmem:[%s273 + $0x14] sm:$0xf]
        %v320 = vld [vmem:[%s273 + $0x18] sm:$0xf]
        %v321 = vld [vmem:[%s273 + $0x1c] sm:$0xf]
        %v322 = vld [vmem:[%s273 + $0x20] sm:$0xf]
        %v323 = vld [vmem:[%s273 + $0x24] sm:$0xf]
        %v324 = vld [vmem:[%s273 + $0x28] sm:$0xf]
        %v325 = vld [vmem:[%s273 + $0x2c] sm:$0xf]
        %v326 = vld [vmem:[%s273 + $0x30] sm:$0xf]
        %v327 = vld [vmem:[%s273 + $0x34] sm:$0xf]
        %v328 = vld [vmem:[%s273 + $0x38] sm:$0xf]
        %v329 = vld [vmem:[%s273 + $0x3c] sm:$0xf]
        %v330 = vld [vmem:[%s273 + $0x40] sm:$0xf]
        %v331 = vld [vmem:[%s273 + $0x44] sm:$0xf]
        %v332 = vld [vmem:[%s273 + $0x48] sm:$0xf]
        %v333 = vld [vmem:[%s273 + $0x4c] sm:$0xf]
        %v334 = vld [vmem:[%s273 + $0x50] sm:$0xf]
        %v335 = vld [vmem:[%s273 + $0x54] sm:$0xf]
        %v336 = vld [vmem:[%s273 + $0x58] sm:$0xf]
        %v337 = vld [vmem:[%s273 + $0x5c] sm:$0xf]
        %v338 = vld [vmem:[%s273 + $0x60] sm:$0xf]
        %v339 = vld [vmem:[%s273 + $0x64] sm:$0xf]
        %v340 = vld [vmem:[%s273 + $0x68] sm:$0xf]
        %v341 = vld [vmem:[%s273 + $0x6c] sm:$0xf]
        %v342 = vld [vmem:[%s273 + $0x70] sm:$0xf]
        %v343 = vld [vmem:[%s273 + $0x74] sm:$0xf]
        %v344 = vld [vmem:[%s273 + $0x78] sm:$0xf]
        %v345 = vld [vmem:[%s273 + $0x7c] sm:$0xf]
        %v347 = vunpack.c.l.b16 %v313
        %v348 = vunpack.c.h.b16 %v313
        %v349 = vpack.c.b16 %v347, %v347
        %v350 = vpack.c.b16 %v348, %v348
        %v385 = vunpack.c.l.b16 %v314
        %v386 = vunpack.c.l.b16 %v315
        %v387 = vunpack.c.l.b16 %v316
        %v388 = vunpack.c.l.b16 %v317
        %v389 = vunpack.c.l.b16 %v318
        %v390 = vunpack.c.l.b16 %v319
        %v391 = vunpack.c.l.b16 %v320
        %v392 = vunpack.c.l.b16 %v321
        %v393 = vunpack.c.l.b16 %v322
        %v394 = vunpack.c.l.b16 %v323
        %v395 = vunpack.c.l.b16 %v324
        %v396 = vunpack.c.l.b16 %v325
        %v397 = vunpack.c.l.b16 %v326
        %v398 = vunpack.c.l.b16 %v327
        %v399 = vunpack.c.l.b16 %v328
        %v400 = vunpack.c.l.b16 %v329
        %v401 = vunpack.c.l.b16 %v330
        %v402 = vunpack.c.l.b16 %v331
        %v403 = vunpack.c.l.b16 %v332
        %v404 = vunpack.c.l.b16 %v333
        %v405 = vunpack.c.l.b16 %v334
        %v406 = vunpack.c.l.b16 %v335
        %v407 = vunpack.c.l.b16 %v336
        %v408 = vunpack.c.l.b16 %v337
        %v409 = vunpack.c.l.b16 %v338
        %v410 = vunpack.c.l.b16 %v339
        %v411 = vunpack.c.l.b16 %v340
        %v412 = vunpack.c.l.b16 %v341
        %v413 = vunpack.c.l.b16 %v342
        %v414 = vunpack.c.l.b16 %v343
        %v415 = vunpack.c.l.b16 %v344
        %v416 = vunpack.c.l.b16 %v345
        %v417 = vpack.c.b16 %v386, %v385
        %v418 = vpack.c.b16 %v388, %v387
        %v419 = vpack.c.b16 %v390, %v389
        %v420 = vpack.c.b16 %v392, %v391
        %v421 = vpack.c.b16 %v394, %v393
        %v422 = vpack.c.b16 %v396, %v395
        %v423 = vpack.c.b16 %v398, %v397
        %v424 = vpack.c.b16 %v400, %v399
        %v425 = vpack.c.b16 %v402, %v401
        %v426 = vpack.c.b16 %v404, %v403
        %v427 = vpack.c.b16 %v406, %v405
        %v428 = vpack.c.b16 %v408, %v407
        %v429 = vpack.c.b16 %v410, %v409
        %v430 = vpack.c.b16 %v412, %v411
        %v431 = vpack.c.b16 %v414, %v413
        %v432 = vpack.c.b16 %v416, %v415
        %449 = vmatprep.subr.bf16.mxu0 0
        %450 = vmatpush1.bf16.msra.mxu0 %v424
        %451 = vmatprep.subr.bf16.mxu0 0
        %452 = vmatpush1.bf16.msra.mxu0 %v423
        %453 = vmatprep.subr.bf16.mxu0 0
        %454 = vmatpush1.bf16.msra.mxu0 %v422
        %455 = vmatprep.subr.bf16.mxu0 0
        %456 = vmatpush1.bf16.msra.mxu0 %v421
        %457 = vmatprep.subr.bf16.mxu0 0
        %458 = vmatpush1.bf16.msra.mxu0 %v420
        %459 = vmatprep.subr.bf16.mxu0 0
        %460 = vmatpush1.bf16.msra.mxu0 %v419
        %461 = vmatprep.subr.bf16.mxu0 0
        %462 = vmatpush1.bf16.msra.mxu0 %v418
        %463 = vmatprep.subr.bf16.mxu0 0
        %464 = vmatpush1.bf16.msra.mxu0 %v417
        %465 = vmatprep.subr.bf16.mxu0 0
        %466 = vmatpush2.bf16.msra.mxu0 %v432
        %467 = vmatprep.subr.bf16.mxu0 0
        %468 = vmatpush2.bf16.msra.mxu0 %v431
        %469 = vmatprep.subr.bf16.mxu0 0
        %470 = vmatpush2.bf16.msra.mxu0 %v430
        %471 = vmatprep.subr.bf16.mxu0 0
        %472 = vmatpush2.bf16.msra.mxu0 %v429
        %473 = vmatprep.subr.bf16.mxu0 0
        %474 = vmatpush2.bf16.msra.mxu0 %v428
        %475 = vmatprep.subr.bf16.mxu0 0
        %476 = vmatpush2.bf16.msra.mxu0 %v427
        %477 = vmatprep.subr.bf16.mxu0 0
        %478 = vmatpush2.bf16.msra.mxu0 %v426
        %479 = vmatprep.subr.bf16.mxu0 0
        %480 = vmatpush2.bf16.msra.mxu0 %v425
        %481 = vmatprep.mubr.bf16.mxu0 %v350
        %482 = vmatmul.mubr.bf16.gmra.mxu0 %v349
        %v483 = vpop.f32.mrf.mxu0
        %v484 = vadd.f32 0.0, %v483
        %v485 = vpop.f32.mrf.mxu0
        %v486 = vpop.f32.mrf.mxu0
        %v487 = vpop.f32.mrf.mxu0
        %488 = vdwg.mxu0
        %v489 = vadd.f32 %v312, %v484
        %490 = vst [vmem:[#allocation2] sm:$0xff] %v489
        %p491 = scmp.eq.s32.totalorder %s28, 1
        // Predicated region
        $region57: #{tpu_custom_call.1} parent=39 // pred_check
          %p492 = pneg %p491
        $region58: #{tpu_custom_call.1} parent=39 // pred_check_branch
          %494 = sbr.rel (%p492) target = $region60
        $region59: #{tpu_custom_call.1} parent=39 // pred_region
          %v495 = vld [vmem:[#allocation2] sm:$0xff]
          %v496 = vld [vmem:[%s2] sm:$0x1]
          %v498 = vlaneseq
          %v499 = vshrl.u32 %v498, 7
          %v500 = vsub.s32 0, %v499
          %v501 = vrot.slane %v496, %v500
          %v503 = vadd.f32 %v495, %v501
          %v504 = vmax.f32 %v503, 0.0
          %v505 = vpack.c.bf16 %v504, %v504
          %v506 = vld [vmem:[#allocation8] sm:$0xf]
          %v507 = vld [vmem:[#allocation8 + $0x4] sm:$0xf]
          %v508 = vld [vmem:[#allocation8 + $0x8] sm:$0xf]
          %v509 = vld [vmem:[#allocation8 + $0xc] sm:$0xf]
          %v510 = vld [vmem:[#allocation8 + $0x10] sm:$0xf]
          %v511 = vld [vmem:[#allocation8 + $0x14] sm:$0xf]
          %v512 = vld [vmem:[#allocation8 + $0x18] sm:$0xf]
          %v513 = vld [vmem:[#allocation8 + $0x1c] sm:$0xf]
          %v514 = vld [vmem:[#allocation8 + $0x20] sm:$0xf]
          %v515 = vld [vmem:[#allocation8 + $0x24] sm:$0xf]
          %v516 = vld [vmem:[#allocation8 + $0x28] sm:$0xf]
          %v517 = vld [vmem:[#allocation8 + $0x2c] sm:$0xf]
          %v518 = vld [vmem:[#allocation8 + $0x30] sm:$0xf]
          %v519 = vld [vmem:[#allocation8 + $0x34] sm:$0xf]
          %v520 = vld [vmem:[#allocation8 + $0x38] sm:$0xf]
          %v521 = vld [vmem:[#allocation8 + $0x3c] sm:$0xf]
          %v522 = vld [vmem:[%s4] sm:$0x1]
          %v524 = vlaneseq
          %v525 = vshrl.u32 %v524, 7
          %v526 = vsub.s32 0, %v525
          %v527 = vrot.slane %v522, %v526
          %v545 = vunpack.c.l.b16 %v506
          %v546 = vunpack.c.l.b16 %v507
          %v547 = vunpack.c.l.b16 %v508
          %v548 = vunpack.c.l.b16 %v509
          %v549 = vunpack.c.l.b16 %v510
          %v550 = vunpack.c.l.b16 %v511
          %v551 = vunpack.c.l.b16 %v512
          %v552 = vunpack.c.l.b16 %v513
          %v553 = vunpack.c.l.b16 %v514
          %v554 = vunpack.c.l.b16 %v515
          %v555 = vunpack.c.l.b16 %v516
          %v556 = vunpack.c.l.b16 %v517
          %v557 = vunpack.c.l.b16 %v518
          %v558 = vunpack.c.l.b16 %v519
          %v559 = vunpack.c.l.b16 %v520
          %v560 = vunpack.c.l.b16 %v521
          %v561 = vpack.c.b16 %v546, %v545
          %v562 = vpack.c.b16 %v548, %v547
          %v563 = vpack.c.b16 %v550, %v549
          %v564 = vpack.c.b16 %v552, %v551
          %v565 = vpack.c.b16 %v554, %v553
          %v566 = vpack.c.b16 %v556, %v555
          %v567 = vpack.c.b16 %v558, %v557
          %v568 = vpack.c.b16 %v560, %v559
          %577 = vmatprep.subr.bf16.mxu0 0
          %578 = vmatpush1.bf16.msra.mxu0 %v568
          %579 = vmatprep.subr.bf16.mxu0 0
          %580 = vmatpush1.bf16.msra.mxu0 %v567
          %581 = vmatprep.subr.bf16.mxu0 0
          %582 = vmatpush1.bf16.msra.mxu0 %v566
          %583 = vmatprep.subr.bf16.mxu0 0
          %584 = vmatpush1.bf16.msra.mxu0 %v565
          %585 = vmatprep.subr.bf16.mxu0 0
          %586 = vmatpush1.bf16.msra.mxu0 %v564
          %587 = vmatprep.subr.bf16.mxu0 0
          %588 = vmatpush1.bf16.msra.mxu0 %v563
          %589 = vmatprep.subr.bf16.mxu0 0
          %590 = vmatpush1.bf16.msra.mxu0 %v562
          %591 = vmatprep.subr.bf16.mxu0 0
          %592 = vmatpush1.bf16.msra.mxu0 %v561
          %593 = vmatprep.subr.bf16.mxu0 0
          %594 = vmatpush2.bf16.msra.mxu0 0
          %595 = vmatprep.subr.bf16.mxu0 0
          %596 = vmatpush2.bf16.msra.mxu0 0
          %597 = vmatprep.subr.bf16.mxu0 0
          %598 = vmatpush2.bf16.msra.mxu0 0
          %599 = vmatprep.subr.bf16.mxu0 0
          %600 = vmatpush2.bf16.msra.mxu0 0
          %601 = vmatprep.subr.bf16.mxu0 0
          %602 = vmatpush2.bf16.msra.mxu0 0
          %603 = vmatprep.subr.bf16.mxu0 0
          %604 = vmatpush2.bf16.msra.mxu0 0
          %605 = vmatprep.subr.bf16.mxu0 0
          %606 = vmatpush2.bf16.msra.mxu0 0
          %607 = vmatprep.subr.bf16.mxu0 0
          %608 = vmatpush2.bf16.msra.mxu0 0
          %609 = vmatprep.mubr.bf16.mxu0 0
          %610 = vmatmul.mubr.bf16.gmra.mxu0 %v505
          %v611 = vpop.f32.mrf.mxu0
          %v612 = vadd.f32 %v527, %v611
          %v613 = vpop.f32.mrf.mxu0
          %v614 = vpop.f32.mrf.mxu0
          %v615 = vpop.f32.mrf.mxu0
          %616 = vdwg.mxu0
          %v617 = vmax.f32 %v612, 0.0
          %v618 = vpack.c.bf16 %v617, %v617
          %619 = vst [vmem:[#allocation9] sm:$0xf] %v618
        $region60: #{tpu_custom_call.1} parent=39 // pred_fallthru
          _
        // Predicated region
        $region61: #{tpu_custom_call.1} parent=39 // pred_check
          %p620 = pneg %p170
        $region62: #{tpu_custom_call.1} parent=39 // pred_check_branch
          %622 = sbr.rel (%p620) target = $region64
        $region63: #{tpu_custom_call.1} parent=39 // pred_region
          %s624 = ssub.s32 64, 64
          %625 = vsyncadd [#allocation5], %s624
          %s626 = smul.addr %s27, 64
          %s627 = scalar_lea.hbm %s5, %s626
          %s629 = sshll.u32 [#allocation9], 4
          %s630 = int_to_ptr.vmem [resolvable:$true] %s629
          %632 = dma.vmem_to_hbm [thread:$0]  %s630, 64, %s627, [#allocation5]
        $region64: #{tpu_custom_call.1} parent=39 // pred_fallthru
          _
        // Predicated region
        $region65: #{tpu_custom_call.1} parent=39 // pred_check
          %p633 = pneg %p170
        $region66: #{tpu_custom_call.1} parent=39 // pred_check_branch
          %635 = sbr.rel (%p633) target = $region68
        $region67: #{tpu_custom_call.1} parent=39 // pred_region
          %636 = dma.done [#allocation5], 64
        $region68: #{tpu_custom_call.1} parent=39 // pred_fallthru
          _
      $region40: #{tpu_custom_call.1} parent=5 // pred_fallthru
        _
      %p637 = scmp.le.s32.totalorder 2, %s18
      // Predicated region
      $region69: #{tpu_custom_call.1} parent=5 // pred_check
        %p638 = pneg %p637
      $region70: #{tpu_custom_call.1} parent=5 // pred_check_branch
        %640 = sbr.rel (%p638) target = $region72
      $region71: #{tpu_custom_call.1} parent=5 // pred_region
        %s641 = ssub.s32 %s18, 2
      $region72: #{tpu_custom_call.1} parent=5 // pred_fallthru
        _
    $region6: #{tpu_custom_call.1} parent=1 // loop_footer
      %s22 = sadd.s32 1, %s18
    $region7: #{tpu_custom_call.1} parent=1 // loop_footer_branch
      %17 = sbr.rel target = $region3
    $region8: #{tpu_custom_call.1} parent=1 // loop_exit
      _
    %642 = vsyncpa [#allocation4], 1
    %s643 = scalar_lea.sflag [#allocation4], 1
    %644 = vsyncpa %s643, 1
    %645 = vsyncpa [#allocation7], 1
    %s646 = scalar_lea.sflag [#allocation7], 1
    %647 = vsyncpa %s646, 1
    %648 = vsyncpa [#allocation5], 1
    %s649 = scalar_lea.sflag [#allocation5], 1
    %650 = vsyncpa %s649, 1

</llo_original>
